<compile_context>
chip_gen: v7x
topology: tpu7x:2x2x1
jax: 0.10.0
libtpu: 0.0.40
codegen_flags: <defaults>
</compile_context>

<pallas_src>
import functools

import jax
import jax.numpy as jnp
import numpy as np
from jax.experimental import pallas as pl
from jax.experimental.pallas import tpu as pltpu

_HAS_BUFFERED = hasattr(pl, "Buffered")


# ---------------------------------------------------------------------------
# Kernels (feature-major: activations are (features, TB) tiles, batch on lanes)
# ---------------------------------------------------------------------------
def _mlp_t_kernel(x_ref, w1t_ref, b1_ref, w2t_ref, b2_ref, o_ref):
    """o = W2.T @ relu(W1.T @ x + b1) + b2   (used for concat AND attention:
    for attention, softmax(attn) is already folded into w1t host-side)."""
    x = x_ref[...]
    h = jnp.dot(w1t_ref[...], x.astype(w1t_ref.dtype),
                preferred_element_type=jnp.float32)
    h = jnp.maximum(h + b1_ref[...].astype(jnp.float32), 0.0)
    o = jnp.dot(w2t_ref[...], h.astype(w2t_ref.dtype),
                preferred_element_type=jnp.float32)
    o_ref[...] = (o + b2_ref[...].astype(jnp.float32)).astype(o_ref.dtype)


def _gating_mlp_t_kernel(x_ref, wgt_ref, bg_ref, sel_ref, w1t_ref, b1_ref,
                         w2t_ref, b2_ref, o_ref, *, n_mod):
    x = x_ref[...].astype(jnp.float32)                      # (K, TB)
    # gate logits / gates, (M, TB): one small matmul against the resident Wg.T
    gl = jnp.dot(wgt_ref[...], x.astype(wgt_ref.dtype),
                 preferred_element_type=jnp.float32)
    g = jax.nn.sigmoid(gl + bg_ref[...].astype(jnp.float32))
    # Expand per-modality gates to per-feature-row gates (K, TB) with pure VPU
    # broadcasts; sel[:, m] is the 0/1 membership column of modality m.
    ge = sel_ref[:, 0:1].astype(jnp.float32) * g[0:1, :]
    for m in range(1, n_mod):
        ge = ge + sel_ref[:, m:m + 1].astype(jnp.float32) * g[m:m + 1, :]
    xg = x * ge                                             # gated concat
    h = jnp.dot(w1t_ref[...], xg.astype(w1t_ref.dtype),
                preferred_element_type=jnp.float32)
    h = jnp.maximum(h + b1_ref[...].astype(jnp.float32), 0.0)
    o = jnp.dot(w2t_ref[...], h.astype(w2t_ref.dtype),
                preferred_element_type=jnp.float32)
    o_ref[...] = (o + b2_ref[...].astype(jnp.float32)).astype(o_ref.dtype)


# ---------------------------------------------------------------------------
# VMEM budgeting
# ---------------------------------------------------------------------------
def _vmem_limit_bytes():
    """Per-generation scoped-VMEM limit (~75% of physical; safe fallback)."""
    cap = 0
    try:
        info = pltpu.get_tpu_info()
        for name in ("vmem_capacity_bytes", "vmem_size_bytes", "vmem_bytes"):
            v = getattr(info, name, None)
            if v:
                cap = int(v)
                break
    except Exception:
        cap = 0
    if cap <= 0:
        cap = 64 << 20  # conservative: v7x physical VMEM per TensorCore
    return int(cap * 3 // 4)  # ~96 MiB on v5e/v6e, ~48 MiB on v7x


def _pick_batch_tile(batch, k_dim, hidden_dim, output_dim, n_mod,
                     resident_bytes, vmem_limit_bytes, bytes_per_elem=4,
                     cap=2048):
    """Largest lane-aligned (multiple-of-128) batch tile such that the
    double-buffered streamed tiles + resident weights + in-kernel f32
    temporaries fit the VMEM budget.  Returns `batch` (one full block) when it
    already fits -- full-extent last dims are always a legal block shape."""
    headroom = 4 << 20  # compiler-internal scratch
    budget = vmem_limit_bytes - 2 * resident_bytes - headroom
    stream = 2 * (k_dim + output_dim) * bytes_per_elem      # 2x-buffered x / out
    work = (2 * k_dim + hidden_dim + output_dim + n_mod) * bytes_per_elem
    per_col = max(stream + work, 1)
    tb = (budget // per_col) // 128 * 128 if budget > 0 else 128
    tb = int(max(128, min(cap, tb)))
    return batch if batch <= tb else tb


def _resident_spec(arr, single_buffer):
    nd = arr.ndim
    shape = arr.shape
    idx = lambda i: (0,) * nd  # constant block index -> stays resident in VMEM
    if single_buffer and _HAS_BUFFERED:
        return pl.BlockSpec(shape, idx, pipeline_mode=pl.Buffered(1))
    return pl.BlockSpec(shape, idx)


# ---------------------------------------------------------------------------
# FusionNetwork wrapper
# ---------------------------------------------------------------------------
class FusionNetwork:
    def __init__(self, input_dims, hidden_dim, output_dim, fusion_type="concat",
                 seed=0, param_dtype=jnp.float32):
        self.input_dims = list(input_dims)
        self.hidden_dim = hidden_dim
        self.output_dim = output_dim
        self.fusion_type = fusion_type
        self.param_dtype = param_dtype

        key = jax.random.PRNGKey(seed)

        def linear(k, fan_in, fan_out):
            kw, kb = jax.random.split(k)
            bound = 1.0 / np.sqrt(fan_in)
            w = jax.random.uniform(kw, (fan_in, fan_out), jnp.float32, -bound, bound)
            b = jax.random.uniform(kb, (1, fan_out), jnp.float32, -bound, bound)
            return w.astype(param_dtype), b.astype(param_dtype)

        k1, k2, k3 = jax.random.split(key, 3)
        n_mod = len(self.input_dims)
        k_dim = sum(self.input_dims)

        if fusion_type == "concat":
            self.fusion_dim = k_dim
        elif fusion_type == "attention":
            self.fusion_dim = max(self.input_dims)
            self.attn = jnp.ones((n_mod,), jnp.float32)  # nn.Parameter(torch.ones(M))
        elif fusion_type == "gating":
            self.fusion_dim = k_dim
            self.gate_w, self.gate_b = linear(k3, self.fusion_dim, n_mod)
            self.wgt = jnp.transpose(self.gate_w)            # (M, K) resident
            self.bgt = jnp.reshape(self.gate_b, (n_mod, 1))  # (M, 1)
            sel = np.zeros((k_dim, n_mod), np.float32)       # 0/1 membership
            off = 0
            for m, d in enumerate(self.input_dims):
                sel[off:off + d, m] = 1.0
                off += d
            self.sel = jnp.asarray(sel)
        else:
            raise ValueError(f"Unknown fusion_type: {fusion_type}")

        self.w1, self.b1 = linear(k1, self.fusion_dim, hidden_dim)
        self.w2, self.b2 = linear(k2, hidden_dim, output_dim)

        # Feature-major (pre-transposed) resident weights / biases.
        self.b1t = jnp.reshape(self.b1, (hidden_dim, 1))
        self.w2t = jnp.transpose(self.w2)                    # (out, H)
        self.b2t = jnp.reshape(self.b2, (output_dim, 1))
        if fusion_type == "attention":
            # modality m (zero-padded to fusion_dim) only touches rows [0, d_m)
            # of W1; keep those slices pre-transposed so softmax(attn) can be
            # folded onto them host-side into one dense (H, sum d_m) weight.
            self.w1t_attn_parts = [jnp.transpose(self.w1[:d])
                                   for d in self.input_dims]
        else:
            self.w1t = jnp.transpose(self.w1)                # (H, K)

    # -------------------- Pallas forward --------------------
    def __call__(self, features):
        batch = features[0].shape[0]
        n_mod = len(self.input_dims)
        k_dim = sum(self.input_dims)

        # Layout plumbing (wrapper-side XLA): one feature-major concat slab
        # (K, B) so the kernel streams lane-dense tiles and stores lane-dense
        # outputs.  No other compute is hoisted out of the kernel.
        x_t = jnp.concatenate([jnp.transpose(f) for f in features], axis=0)
        x_t = x_t.astype(self.param_dtype
                         if self.param_dtype != jnp.float32 else jnp.float32)

        if self.fusion_type == "concat":
            kernel = _mlp_t_kernel
            weights = (self.w1t, self.b1t, self.w2t, self.b2t)
        elif self.fusion_type == "attention":
            # fc1(sum_m a_m * pad(f_m)) == concat(f) @ concat_m(a_m * W1[:d_m]):
            # fold softmax(attn) into the resident weight once per call (tiny).
            a = jax.nn.softmax(self.attn.astype(jnp.float32))
            w1t_attn = jnp.concatenate(
                [a[m] * self.w1t_attn_parts[m].astype(jnp.float32)
                 for m in range(n_mod)], axis=1).astype(self.param_dtype)
            kernel = _mlp_t_kernel
            weights = (w1t_attn, self.b1t, self.w2t, self.b2t)
        elif self.fusion_type == "gating":
            kernel = functools.partial(_gating_mlp_t_kernel, n_mod=n_mod)
            weights = (self.wgt, self.bgt, self.sel, self.w1t, self.b1t,
                       self.w2t, self.b2t)
        else:
            raise ValueError(f"Unknown fusion_type: {self.fusion_type}")

        vmem_limit = _vmem_limit_bytes()
        resident_bytes = sum(int(w.size) * w.dtype.itemsize for w in weights)
        tb = _pick_batch_tile(batch, k_dim, self.hidden_dim, self.output_dim,
                              n_mod, resident_bytes, vmem_limit)
        grid = (pl.cdiv(batch, tb),)
        out_shape = jax.ShapeDtypeStruct((self.output_dim, batch), jnp.float32)

        def run(single_buffer_weights):
            x_spec = pl.BlockSpec((k_dim, tb), lambda i: (0, i))
            out_spec = pl.BlockSpec((self.output_dim, tb), lambda i: (0, i))
            in_specs = [x_spec] + [_resident_spec(w, single_buffer_weights)
                                   for w in weights]
            return pl.pallas_call(
                kernel,
                out_shape=out_shape,
                grid=grid,
                in_specs=in_specs,
                out_specs=out_spec,
                compiler_params=pltpu.CompilerParams(
                    dimension_semantics=("parallel",),
                    vmem_limit_bytes=vmem_limit),
            )(x_t, *weights)

        if _HAS_BUFFERED:
            try:
                out_t = run(single_buffer_weights=True)
            except Exception:
                # Fallback if Buffered(1) is rejected by this jax/Mosaic build.
                out_t = run(single_buffer_weights=False)
        else:
            out_t = run(single_buffer_weights=False)

        return jnp.transpose(out_t)  # back to (batch, output_dim)

    # -------------------- pure-JAX reference (torch-faithful) --------------------
    def reference(self, features):
        w1 = self.w1.astype(jnp.float32)
        b1 = self.b1.astype(jnp.float32)
        w2 = self.w2.astype(jnp.float32)
        b2 = self.b2.astype(jnp.float32)
        if self.fusion_type == "concat":
            x = jnp.concatenate(features, axis=-1)
        elif self.fusion_type == "attention":
            w = jax.nn.softmax(self.attn.astype(jnp.float32))
            padded = [jnp.pad(f, ((0, 0), (0, self.fusion_dim - f.shape[-1])))
                      for f in features]
            x = sum(w[i] * padded[i] for i in range(len(features)))
        else:  # gating
            x_cat = jnp.concatenate(features, axis=-1)
            gates = jax.nn.sigmoid(x_cat @ self.gate_w.astype(jnp.float32)
                                   + self.gate_b.astype(jnp.float32))
            x = jnp.concatenate(
                [gates[:, i:i + 1] * f for i, f in enumerate(features)], axis=-1)
        h = jnp.maximum(x @ w1 + b1, 0.0)
        return h @ w2 + b2


# ---------------------------------------------------------------------------
if __name__ == "__main__":
    input_dims = [12, 20]
    hidden_dim = 32
    output_dim = 8
    batch = 2

    key = jax.random.PRNGKey(0)
    keys = jax.random.split(key, len(input_dims))
    features = [
        jax.random.normal(k, (batch, d), jnp.float32)
        for k, d in zip(keys, input_dims)
    ]

    for fusion_type in ("concat", "attention", "gating"):
        net = FusionNetwork(input_dims, hidden_dim, output_dim,
                            fusion_type=fusion_type, seed=42)
        out = net(features)
        out = jax.block_until_ready(out)
        ref = net.reference(features)
        assert out.shape == (batch, output_dim)
        np.testing.assert_allclose(np.asarray(out), np.asarray(ref),
                                   rtol=1e-5, atol=1e-5)

    print("KERNEL_OK")
</pallas_src>

<mosaic_0001>
module attributes {stable_mosaic.version = 11 : i64} {
  func.func @_mlp_t_kernel(%arg0: i32, %arg1: memref<32x2xf32, #tpu.memory_space<vmem>>, %arg2: memref<32x32xf32, #tpu.memory_space<vmem>>, %arg3: memref<32x1xf32, #tpu.memory_space<vmem>>, %arg4: memref<8x32xf32, #tpu.memory_space<vmem>>, %arg5: memref<8x1xf32, #tpu.memory_space<vmem>>, %arg6: memref<8x2xf32, #tpu.memory_space<vmem>>) attributes {dimension_semantics = [#tpu.dimension_semantics<parallel>], iteration_bounds = array<i64: 1>, scalar_prefetch = 0 : i64, scratch_operands = 0 : i64, tpu.core_type = #tpu.core_type<tc>, window_params = [{transform_indices = @transform_0, window_bounds = array<i64: 32, 2>}, {pipeline_mode = #tpu.pipeline_mode<synchronous>, transform_indices = @transform_1, window_bounds = array<i64: 32, 32>}, {pipeline_mode = #tpu.pipeline_mode<synchronous>, transform_indices = @transform_2, window_bounds = array<i64: 32, 1>}, {pipeline_mode = #tpu.pipeline_mode<synchronous>, transform_indices = @transform_3, window_bounds = array<i64: 8, 32>}, {pipeline_mode = #tpu.pipeline_mode<synchronous>, transform_indices = @transform_4, window_bounds = array<i64: 8, 1>}, {transform_indices = @transform_5, window_bounds = array<i64: 8, 2>}]} {
    %c0 = arith.constant 0 : index
    %c0_0 = arith.constant 0 : index
    %0 = vector.load %arg1[%c0, %c0_0] : memref<32x2xf32, #tpu.memory_space<vmem>>, vector<32x2xf32>
    %c0_1 = arith.constant 0 : index
    %c0_2 = arith.constant 0 : index
    %1 = vector.load %arg2[%c0_1, %c0_2] : memref<32x32xf32, #tpu.memory_space<vmem>>, vector<32x32xf32>
    %cst = arith.constant dense<0.000000e+00> : vector<32x2xf32>
    %2 = tpu.matmul %1, %0, %cst {dimension_numbers = #tpu.dot_dimension_numbers<[1], [0], [0], [1], [0, 0, 1, 1], [], []>} : vector<32x32xf32>, vector<32x2xf32>, vector<32x2xf32> -> vector<32x2xf32>
    %c0_3 = arith.constant 0 : index
    %c0_4 = arith.constant 0 : index
    %3 = vector.load %arg3[%c0_3, %c0_4] : memref<32x1xf32, #tpu.memory_space<vmem>>, vector<32x1xf32>
    %4 = vector.broadcast %3 : vector<32x1xf32> to vector<32x2xf32>
    %5 = arith.addf %2, %4 : vector<32x2xf32>
    %cst_5 = arith.constant 0.000000e+00 : f32
    %6 = vector.broadcast %cst_5 : f32 to vector<32x2xf32>
    %7 = arith.maximumf %5, %6 : vector<32x2xf32>
    %c0_6 = arith.constant 0 : index
    %c0_7 = arith.constant 0 : index
    %8 = vector.load %arg4[%c0_6, %c0_7] : memref<8x32xf32, #tpu.memory_space<vmem>>, vector<8x32xf32>
    %cst_8 = arith.constant dense<0.000000e+00> : vector<8x2xf32>
    %9 = tpu.matmul %8, %7, %cst_8 {dimension_numbers = #tpu.dot_dimension_numbers<[1], [0], [0], [1], [0, 0, 1, 1], [], []>} : vector<8x32xf32>, vector<32x2xf32>, vector<8x2xf32> -> vector<8x2xf32>
    %c0_9 = arith.constant 0 : index
    %c0_10 = arith.constant 0 : index
    %10 = vector.load %arg5[%c0_9, %c0_10] : memref<8x1xf32, #tpu.memory_space<vmem>>, vector<8x1xf32>
    %11 = vector.broadcast %10 : vector<8x1xf32> to vector<8x2xf32>
    %12 = arith.addf %9, %11 : vector<8x2xf32>
    %c0_11 = arith.constant 0 : index
    %c0_12 = arith.constant 0 : index
    %13 = vector.load %arg6[%c0_11, %c0_12] : memref<8x2xf32, #tpu.memory_space<vmem>>, vector<8x2xf32>
    tpu.vector_store %arg6[%c0_11, %c0_12], %12 {strides = array<i32>} : memref<8x2xf32, #tpu.memory_space<vmem>>, vector<8x2xf32>,
    return
  }
  func.func @transform_0(%arg0: i32) -> (i32, i32) {
    %c0_i32 = arith.constant 0 : i32
    %c0_i32_0 = arith.constant 0 : i32
    return %c0_i32, %arg0 : i32, i32
  }
  func.func @transform_1(%arg0: i32) -> (i32, i32) {
    %c0_i32 = arith.constant 0 : i32
    %c0_i32_0 = arith.constant 0 : i32
    %c0_i32_1 = arith.constant 0 : i32
    return %c0_i32, %c0_i32_0 : i32, i32
  }
  func.func @transform_2(%arg0: i32) -> (i32, i32) {
    %c0_i32 = arith.constant 0 : i32
    %c0_i32_0 = arith.constant 0 : i32
    %c0_i32_1 = arith.constant 0 : i32
    return %c0_i32, %c0_i32_0 : i32, i32
  }
  func.func @transform_3(%arg0: i32) -> (i32, i32) {
    %c0_i32 = arith.constant 0 : i32
    %c0_i32_0 = arith.constant 0 : i32
    %c0_i32_1 = arith.constant 0 : i32
    return %c0_i32, %c0_i32_0 : i32, i32
  }
  func.func @transform_4(%arg0: i32) -> (i32, i32) {
    %c0_i32 = arith.constant 0 : i32
    %c0_i32_0 = arith.constant 0 : i32
    %c0_i32_1 = arith.constant 0 : i32
    return %c0_i32, %c0_i32_0 : i32, i32
  }
  func.func @transform_5(%arg0: i32) -> (i32, i32) {
    %c0_i32 = arith.constant 0 : i32
    %c0_i32_0 = arith.constant 0 : i32
    return %c0_i32, %arg0 : i32, i32
  }
}

module attributes {stable_mosaic.version = 11 : i64} {
  func.func @_mlp_t_kernel(%arg0: i32, %arg1: memref<32x2xf32, #tpu.memory_space<vmem>>, %arg2: memref<32x32xf32, #tpu.memory_space<vmem>>, %arg3: memref<32x1xf32, #tpu.memory_space<vmem>>, %arg4: memref<8x32xf32, #tpu.memory_space<vmem>>, %arg5: memref<8x1xf32, #tpu.memory_space<vmem>>, %arg6: memref<8x2xf32, #tpu.memory_space<vmem>>) attributes {dimension_semantics = [#tpu.dimension_semantics<parallel>], iteration_bounds = array<i64: 1>, scalar_prefetch = 0 : i64, scratch_operands = 0 : i64, tpu.core_type = #tpu.core_type<tc>, window_params = [{transform_indices = @transform_0, window_bounds = array<i64: 32, 2>}, {pipeline_mode = #tpu.pipeline_mode<synchronous>, transform_indices = @transform_1, window_bounds = array<i64: 32, 32>}, {pipeline_mode = #tpu.pipeline_mode<synchronous>, transform_indices = @transform_2, window_bounds = array<i64: 32, 1>}, {pipeline_mode = #tpu.pipeline_mode<synchronous>, transform_indices = @transform_3, window_bounds = array<i64: 8, 32>}, {pipeline_mode = #tpu.pipeline_mode<synchronous>, transform_indices = @transform_4, window_bounds = array<i64: 8, 1>}, {transform_indices = @transform_5, window_bounds = array<i64: 8, 2>}]} {
    %c0 = arith.constant 0 : index
    %c0_0 = arith.constant 0 : index
    %0 = vector.load %arg1[%c0, %c0_0] : memref<32x2xf32, #tpu.memory_space<vmem>>, vector<32x2xf32>
    %c0_1 = arith.constant 0 : index
    %c0_2 = arith.constant 0 : index
    %1 = vector.load %arg2[%c0_1, %c0_2] : memref<32x32xf32, #tpu.memory_space<vmem>>, vector<32x32xf32>
    %cst = arith.constant dense<0.000000e+00> : vector<32x2xf32>
    %2 = tpu.matmul %1, %0, %cst {dimension_numbers = #tpu.dot_dimension_numbers<[1], [0], [0], [1], [0, 0, 1, 1], [], []>} : vector<32x32xf32>, vector<32x2xf32>, vector<32x2xf32> -> vector<32x2xf32>
    %c0_3 = arith.constant 0 : index
    %c0_4 = arith.constant 0 : index
    %3 = vector.load %arg3[%c0_3, %c0_4] : memref<32x1xf32, #tpu.memory_space<vmem>>, vector<32x1xf32>
    %4 = vector.broadcast %3 : vector<32x1xf32> to vector<32x2xf32>
    %5 = arith.addf %2, %4 : vector<32x2xf32>
    %cst_5 = arith.constant 0.000000e+00 : f32
    %6 = vector.broadcast %cst_5 : f32 to vector<32x2xf32>
    %7 = arith.maximumf %5, %6 : vector<32x2xf32>
    %c0_6 = arith.constant 0 : index
    %c0_7 = arith.constant 0 : index
    %8 = vector.load %arg4[%c0_6, %c0_7] : memref<8x32xf32, #tpu.memory_space<vmem>>, vector<8x32xf32>
    %cst_8 = arith.constant dense<0.000000e+00> : vector<8x2xf32>
    %9 = tpu.matmul %8, %7, %cst_8 {dimension_numbers = #tpu.dot_dimension_numbers<[1], [0], [0], [1], [0, 0, 1, 1], [], []>} : vector<8x32xf32>, vector<32x2xf32>, vector<8x2xf32> -> vector<8x2xf32>
    %c0_9 = arith.constant 0 : index
    %c0_10 = arith.constant 0 : index
    %10 = vector.load %arg5[%c0_9, %c0_10] : memref<8x1xf32, #tpu.memory_space<vmem>>, vector<8x1xf32>
    %11 = vector.broadcast %10 : vector<8x1xf32> to vector<8x2xf32>
    %12 = arith.addf %9, %11 : vector<8x2xf32>
    %c0_11 = arith.constant 0 : index
    %c0_12 = arith.constant 0 : index
    %13 = vector.load %arg6[%c0_11, %c0_12] : memref<8x2xf32, #tpu.memory_space<vmem>>, vector<8x2xf32>
    tpu.vector_store %arg6[%c0_11, %c0_12], %12 {strides = array<i32>} : memref<8x2xf32, #tpu.memory_space<vmem>>, vector<8x2xf32>,
    return
  }
  func.func @transform_0(%arg0: i32) -> (i32, i32) {
    %c0_i32 = arith.constant 0 : i32
    %c0_i32_0 = arith.constant 0 : i32
    return %c0_i32, %arg0 : i32, i32
  }
  func.func @transform_1(%arg0: i32) -> (i32, i32) {
    %c0_i32 = arith.constant 0 : i32
    %c0_i32_0 = arith.constant 0 : i32
    %c0_i32_1 = arith.constant 0 : i32
    return %c0_i32, %c0_i32_0 : i32, i32
  }
  func.func @transform_2(%arg0: i32) -> (i32, i32) {
    %c0_i32 = arith.constant 0 : i32
    %c0_i32_0 = arith.constant 0 : i32
    %c0_i32_1 = arith.constant 0 : i32
    return %c0_i32, %c0_i32_0 : i32, i32
  }
  func.func @transform_3(%arg0: i32) -> (i32, i32) {
    %c0_i32 = arith.constant 0 : i32
    %c0_i32_0 = arith.constant 0 : i32
    %c0_i32_1 = arith.constant 0 : i32
    return %c0_i32, %c0_i32_0 : i32, i32
  }
  func.func @transform_4(%arg0: i32) -> (i32, i32) {
    %c0_i32 = arith.constant 0 : i32
    %c0_i32_0 = arith.constant 0 : i32
    %c0_i32_1 = arith.constant 0 : i32
    return %c0_i32, %c0_i32_0 : i32, i32
  }
  func.func @transform_5(%arg0: i32) -> (i32, i32) {
    %c0_i32 = arith.constant 0 : i32
    %c0_i32_0 = arith.constant 0 : i32
    return %c0_i32, %arg0 : i32, i32
  }
}

</mosaic_0001>

<llo_original>
// kernel: tpu_custom_call.1
$region0: #{tpu_custom_call.1}
  #allocation0 [shape = 'u32[]', space=smem, size = 0x4, offset = 0x4, fixed_abs, tag = 'smem constant byte address 0x4 - core index']
  #allocation1 [shape = 'u32[144,128]{1,0:T(1,128)}', space=vmem, size = 0x12000, scoped, tag = 'internal scratch']
  %s0 = inlined_call_operand.vmem [shape: f32[32,2], index: 0, kind: input, shape index: {}]
  %s1 = inlined_call_operand.vmem [shape: f32[32,32], index: 1, kind: input, shape index: {}]
  %s2 = inlined_call_operand.vmem [shape: f32[32,1], index: 2, kind: input, shape index: {}]
  %s3 = inlined_call_operand.vmem [shape: f32[8,32], index: 3, kind: input, shape index: {}]
  %s4 = inlined_call_operand.vmem [shape: f32[8,1], index: 4, kind: input, shape index: {}]
  %s5 = inlined_call_operand.vmem [shape: f32[8,2], index: 5, kind: output, shape index: {}]
  %s6 = sld [smem:[#allocation0]]
  $region30: #{tpu_custom_call.1} parent=0
    _
  %s8 = ssub.s32 1, %s6
  %s9 = scalar_select 0, %s8, %s6
  // Predicated region
  $region2: #{tpu_custom_call.1} parent=0 // pred_check
    _
  $region3: #{tpu_custom_call.1} parent=0 // pred_check_branch
    %11 = sbr.rel (0) target = $region5
  $region4: #{tpu_custom_call.1} parent=0 // pred_region
    _
  $region5: #{tpu_custom_call.1} parent=0 // pred_fallthru
    _
  // Predicated region
  $region6: #{tpu_custom_call.1} parent=0 // pred_check
    _
  $region7: #{tpu_custom_call.1} parent=0 // pred_check_branch
    %13 = sbr.rel (0) target = $region9
  $region8: #{tpu_custom_call.1} parent=0 // pred_region
    _
  $region9: #{tpu_custom_call.1} parent=0 // pred_fallthru
    _
  // Predicated region
  $region10: #{tpu_custom_call.1} parent=0 // pred_check
    _
  $region11: #{tpu_custom_call.1} parent=0 // pred_check_branch
    %15 = sbr.rel (0) target = $region13
  $region12: #{tpu_custom_call.1} parent=0 // pred_region
    _
  $region13: #{tpu_custom_call.1} parent=0 // pred_fallthru
    _
  // Predicated region
  $region14: #{tpu_custom_call.1} parent=0 // pred_check
    _
  $region15: #{tpu_custom_call.1} parent=0 // pred_check_branch
    %17 = sbr.rel (0) target = $region17
  $region16: #{tpu_custom_call.1} parent=0 // pred_region
    _
  $region17: #{tpu_custom_call.1} parent=0 // pred_fallthru
    _
  // Predicated region
  $region18: #{tpu_custom_call.1} parent=0 // pred_check
    _
  $region19: #{tpu_custom_call.1} parent=0 // pred_check_branch
    %19 = sbr.rel (0) target = $region21
  $region20: #{tpu_custom_call.1} parent=0 // pred_region
    _
  $region21: #{tpu_custom_call.1} parent=0 // pred_fallthru
    _
  %v20 = vld [vmem:[%s0] sm:$0xff]
  %v21 = vld [vmem:[%s0 + $0x8] sm:$0xff]
  %v22 = vld [vmem:[%s0 + $0x10] sm:$0xff]
  %v23 = vld [vmem:[%s0 + $0x18] sm:$0xff]
  %v24 = vld [vmem:[%s1] sm:$0xff]
  %v25 = vld [vmem:[%s1 + $0x8] sm:$0xff]
  %v26 = vld [vmem:[%s1 + $0x10] sm:$0xff]
  %v27 = vld [vmem:[%s1 + $0x18] sm:$0xff]
  %v28 = vld [vmem:[%s2] sm:$0xff]
  %v29 = vld [vmem:[%s2 + $0x8] sm:$0xff]
  %v30 = vld [vmem:[%s2 + $0x10] sm:$0xff]
  %v31 = vld [vmem:[%s2 + $0x18] sm:$0xff]
  %33 = vset.pattern.permute.xlu0 0
  %34 = vperm.xlu0 %33, %v28
  %v35 = vpop.permute.xlu0 %34
  %38 = vset.pattern.permute.xlu0 0
  %39 = vperm.xlu0 %38, %v29
  %v40 = vpop.permute.xlu0 %39
  %43 = vset.pattern.permute.xlu0 0
  %44 = vperm.xlu0 %43, %v30
  %v45 = vpop.permute.xlu0 %44
  %48 = vset.pattern.permute.xlu0 0
  %49 = vperm.xlu0 %48, %v31
  %v50 = vpop.permute.xlu0 %49
  %vm52 = vcmask 261120
  %v54 = vsel %vm52, %v24, 0
  %v57 = vsel %vm52, %v25, 0
  %v60 = vsel %vm52, %v26, 0
  %v63 = vsel %vm52, %v27, 0
  %65 = vmatprep.subr.mxu0 0.0
  %66 = vmatpush1.msra.mxu0 %v20
  %67 = vmatprep.subr.mxu0 0.0
  %68 = vmatpush1.msra.mxu0 %v21
  %69 = vmatprep.subr.mxu0 0.0
  %70 = vmatpush1.msra.mxu0 %v22
  %71 = vmatprep.subr.mxu0 0.0
  %72 = vmatpush1.msra.mxu0 %v23
  %73 = vmatprep.subr.mxu0 0.0
  %74 = vmatpush1.msra.mxu0 0.0
  %75 = vmatprep.subr.mxu0 0.0
  %76 = vmatpush1.msra.mxu0 0.0
  %77 = vmatprep.subr.mxu0 0.0
  %78 = vmatpush1.msra.mxu0 0.0
  %79 = vmatprep.subr.mxu0 0.0
  %80 = vmatpush1.msra.mxu0 0.0
  %81 = vmatprep.subr.mxu0 0.0
  %82 = vmatpush1.msra.mxu0 0.0
  %83 = vmatprep.subr.mxu0 0.0
  %84 = vmatpush1.msra.mxu0 0.0
  %85 = vmatprep.subr.mxu0 0.0
  %86 = vmatpush1.msra.mxu0 0.0
  %87 = vmatprep.subr.mxu0 0.0
  %88 = vmatpush1.msra.mxu0 0.0
  %89 = vmatprep.subr.mxu0 0.0
  %90 = vmatpush1.msra.mxu0 0.0
  %91 = vmatprep.subr.mxu0 0.0
  %92 = vmatpush1.msra.mxu0 0.0
  %93 = vmatprep.subr.mxu0 0.0
  %94 = vmatpush1.msra.mxu0 0.0
  %95 = vmatprep.subr.mxu0 0.0
  %96 = vmatpush1.msra.mxu0 0.0
  %97 = vmatprep.subr.mxu0 0.0
  %98 = vmatpush1.msra.mxu0 0.0
  %99 = vmatprep.subr.mxu0 0.0
  %100 = vmatpush1.msra.mxu0 0.0
  %101 = vmatprep.subr.mxu0 0.0
  %102 = vmatpush1.msra.mxu0 0.0
  %103 = vmatprep.subr.mxu0 0.0
  %104 = vmatpush1.msra.mxu0 0.0
  %105 = vmatprep.subr.mxu0 0.0
  %106 = vmatpush1.msra.mxu0 0.0
  %107 = vmatprep.subr.mxu0 0.0
  %108 = vmatpush1.msra.mxu0 0.0
  %109 = vmatprep.subr.mxu0 0.0
  %110 = vmatpush1.msra.mxu0 0.0
  %111 = vmatprep.subr.mxu0 0.0
  %112 = vmatpush1.msra.mxu0 0.0
  %113 = vmatprep.subr.mxu0 0.0
  %114 = vmatpush1.msra.mxu0 0.0
  %115 = vmatprep.subr.mxu0 0.0
  %116 = vmatpush1.msra.mxu0 0.0
  %117 = vmatprep.subr.mxu0 0.0
  %118 = vmatpush1.msra.mxu0 0.0
  %119 = vmatprep.subr.mxu0 0.0
  %120 = vmatpush1.msra.mxu0 0.0
  %121 = vmatprep.subr.mxu0 0.0
  %122 = vmatpush1.msra.mxu0 0.0
  %123 = vmatprep.subr.mxu0 0.0
  %124 = vmatpush1.msra.mxu0 0.0
  %125 = vmatprep.subr.mxu0 0.0
  %126 = vmatpush1.msra.mxu0 0.0
  %127 = vmatprep.subr.mxu0 0.0
  %128 = vmatpush1.msra.mxu0 0.0
  %129 = vmatprep.mubr.f32.mxu0 0.0
  %130 = vmatmul.mubr.f32.gmra.mrb[0].mxu0 %v54
  %v131 = vpop.f32.mrb[0].mxu0
  %v132 = vadd.f32 %v35, %v131
  %v133 = vpop.f32.mrb[0].mxu0
  %134 = vmatprep.mubr.f32.mxu0 0.0
  %135 = vmatmul.mubr.f32.gmra.mrb[0].mxu0 %v57
  %v136 = vpop.f32.mrb[0].mxu0
  %v137 = vadd.f32 %v40, %v136
  %v138 = vpop.f32.mrb[0].mxu0
  %139 = vmatprep.mubr.f32.mxu0 0.0
  %140 = vmatmul.mubr.f32.gmra.mrb[0].mxu0 %v60
  %v141 = vpop.f32.mrb[0].mxu0
  %v142 = vadd.f32 %v45, %v141
  %v143 = vpop.f32.mrb[0].mxu0
  %144 = vmatprep.mubr.f32.mxu0 0.0
  %145 = vmatmul.mubr.f32.gmra.mrb[0].mxu0 %v63
  %v146 = vpop.f32.mrb[0].mxu0
  %v147 = vadd.f32 %v50, %v146
  %v148 = vpop.f32.mrb[0].mxu0
  %149 = vdwg.mxu0
  %v150 = vmax.f32 %v132, 0.0
  %v151 = vmax.f32 %v137, 0.0
  %v152 = vmax.f32 %v142, 0.0
  %v153 = vmax.f32 %v147, 0.0
  %v154 = vld [vmem:[%s3] sm:$0xff]
  %v155 = vld [vmem:[%s4] sm:$0xff]
  %157 = vset.pattern.permute.xlu0 0
  %158 = vperm.xlu0 %157, %v155
  %v159 = vpop.permute.xlu0 %158
  %v162 = vsel %vm52, %v154, 0
  %164 = vmatprep.subr.mxu0 0.0
  %165 = vmatpush1.msra.mxu0 %v150
  %166 = vmatprep.subr.mxu0 0.0
  %167 = vmatpush1.msra.mxu0 %v151
  %168 = vmatprep.subr.mxu0 0.0
  %169 = vmatpush1.msra.mxu0 %v152
  %170 = vmatprep.subr.mxu0 0.0
  %171 = vmatpush1.msra.mxu0 %v153
  %172 = vmatprep.subr.mxu0 0.0
  %173 = vmatpush1.msra.mxu0 0.0
  %174 = vmatprep.subr.mxu0 0.0
  %175 = vmatpush1.msra.mxu0 0.0
  %176 = vmatprep.subr.mxu0 0.0
  %177 = vmatpush1.msra.mxu0 0.0
  %178 = vmatprep.subr.mxu0 0.0
  %179 = vmatpush1.msra.mxu0 0.0
  %180 = vmatprep.subr.mxu0 0.0
  %181 = vmatpush1.msra.mxu0 0.0
  %182 = vmatprep.subr.mxu0 0.0
  %183 = vmatpush1.msra.mxu0 0.0
  %184 = vmatprep.subr.mxu0 0.0
  %185 = vmatpush1.msra.mxu0 0.0
  %186 = vmatprep.subr.mxu0 0.0
  %187 = vmatpush1.msra.mxu0 0.0
  %188 = vmatprep.subr.mxu0 0.0
  %189 = vmatpush1.msra.mxu0 0.0
  %190 = vmatprep.subr.mxu0 0.0
  %191 = vmatpush1.msra.mxu0 0.0
  %192 = vmatprep.subr.mxu0 0.0
  %193 = vmatpush1.msra.mxu0 0.0
  %194 = vmatprep.subr.mxu0 0.0
  %195 = vmatpush1.msra.mxu0 0.0
  %196 = vmatprep.subr.mxu0 0.0
  %197 = vmatpush1.msra.mxu0 0.0
  %198 = vmatprep.subr.mxu0 0.0
  %199 = vmatpush1.msra.mxu0 0.0
  %200 = vmatprep.subr.mxu0 0.0
  %201 = vmatpush1.msra.mxu0 0.0
  %202 = vmatprep.subr.mxu0 0.0
  %203 = vmatpush1.msra.mxu0 0.0
  %204 = vmatprep.subr.mxu0 0.0
  %205 = vmatpush1.msra.mxu0 0.0
  %206 = vmatprep.subr.mxu0 0.0
  %207 = vmatpush1.msra.mxu0 0.0
  %208 = vmatprep.subr.mxu0 0.0
  %209 = vmatpush1.msra.mxu0 0.0
  %210 = vmatprep.subr.mxu0 0.0
  %211 = vmatpush1.msra.mxu0 0.0
  %212 = vmatprep.subr.mxu0 0.0
  %213 = vmatpush1.msra.mxu0 0.0
  %214 = vmatprep.subr.mxu0 0.0
  %215 = vmatpush1.msra.mxu0 0.0
  %216 = vmatprep.subr.mxu0 0.0
  %217 = vmatpush1.msra.mxu0 0.0
  %218 = vmatprep.subr.mxu0 0.0
  %219 = vmatpush1.msra.mxu0 0.0
  %220 = vmatprep.subr.mxu0 0.0
  %221 = vmatpush1.msra.mxu0 0.0
  %222 = vmatprep.subr.mxu0 0.0
  %223 = vmatpush1.msra.mxu0 0.0
  %224 = vmatprep.subr.mxu0 0.0
  %225 = vmatpush1.msra.mxu0 0.0
  %226 = vmatprep.subr.mxu0 0.0
  %227 = vmatpush1.msra.mxu0 0.0
  %228 = vmatprep.mubr.f32.mxu0 0.0
  %229 = vmatmul.mubr.f32.gmra.mrb[0].mxu0 %v162
  %v230 = vpop.f32.mrb[0].mxu0
  %v231 = vadd.f32 %v159, %v230
  %v232 = vpop.f32.mrb[0].mxu0
  %233 = vdwg.mxu0
  %vm234 = vcmask 15360
  %235 = vst.msk [vmem:[%s5] sm:$0xff] %vm234, %v231
  // Predicated region
  $region22: #{tpu_custom_call.1} parent=0 // pred_check
    _
  $region23: #{tpu_custom_call.1} parent=0 // pred_check_branch
    %237 = sbr.rel (0) target = $region25
  $region24: #{tpu_custom_call.1} parent=0 // pred_region
    _
  $region25: #{tpu_custom_call.1} parent=0 // pred_fallthru
    _
  // Predicated region
  $region26: #{tpu_custom_call.1} parent=0 // pred_check
    _
  $region27: #{tpu_custom_call.1} parent=0 // pred_check_branch
    %239 = sbr.rel (0) target = $region29
  $region28: #{tpu_custom_call.1} parent=0 // pred_region
    _
  $region29: #{tpu_custom_call.1} parent=0 // pred_fallthru
    _

// kernel: tpu_custom_call.1
$region0: #{tpu_custom_call.1}
  #allocation0 [shape = 'u32[]', space=smem, size = 0x4, offset = 0x4, fixed_abs, tag = 'smem constant byte address 0x4 - core index']
  #allocation1 [shape = 'u32[144,128]{1,0:T(1,128)}', space=vmem, size = 0x12000, scoped, tag = 'internal scratch']
  %s0 = inlined_call_operand.vmem [shape: f32[32,2], index: 0, kind: input, shape index: {}]
  %s1 = inlined_call_operand.vmem [shape: f32[32,32], index: 1, kind: input, shape index: {}]
  %s2 = inlined_call_operand.vmem [shape: f32[32,1], index: 2, kind: input, shape index: {}]
  %s3 = inlined_call_operand.vmem [shape: f32[8,32], index: 3, kind: input, shape index: {}]
  %s4 = inlined_call_operand.vmem [shape: f32[8,1], index: 4, kind: input, shape index: {}]
  %s5 = inlined_call_operand.vmem [shape: f32[8,2], index: 5, kind: output, shape index: {}]
  %s6 = sld [smem:[#allocation0]]
  $region30: #{tpu_custom_call.1} parent=0
    _
  %s8 = ssub.s32 1, %s6
  %s9 = scalar_select 0, %s8, %s6
  // Predicated region
  $region2: #{tpu_custom_call.1} parent=0 // pred_check
    _
  $region3: #{tpu_custom_call.1} parent=0 // pred_check_branch
    %11 = sbr.rel (0) target = $region5
  $region4: #{tpu_custom_call.1} parent=0 // pred_region
    _
  $region5: #{tpu_custom_call.1} parent=0 // pred_fallthru
    _
  // Predicated region
  $region6: #{tpu_custom_call.1} parent=0 // pred_check
    _
  $region7: #{tpu_custom_call.1} parent=0 // pred_check_branch
    %13 = sbr.rel (0) target = $region9
  $region8: #{tpu_custom_call.1} parent=0 // pred_region
    _
  $region9: #{tpu_custom_call.1} parent=0 // pred_fallthru
    _
  // Predicated region
  $region10: #{tpu_custom_call.1} parent=0 // pred_check
    _
  $region11: #{tpu_custom_call.1} parent=0 // pred_check_branch
    %15 = sbr.rel (0) target = $region13
  $region12: #{tpu_custom_call.1} parent=0 // pred_region
    _
  $region13: #{tpu_custom_call.1} parent=0 // pred_fallthru
    _
  // Predicated region
  $region14: #{tpu_custom_call.1} parent=0 // pred_check
    _
  $region15: #{tpu_custom_call.1} parent=0 // pred_check_branch
    %17 = sbr.rel (0) target = $region17
  $region16: #{tpu_custom_call.1} parent=0 // pred_region
    _
  $region17: #{tpu_custom_call.1} parent=0 // pred_fallthru
    _
  // Predicated region
  $region18: #{tpu_custom_call.1} parent=0 // pred_check
    _
  $region19: #{tpu_custom_call.1} parent=0 // pred_check_branch
    %19 = sbr.rel (0) target = $region21
  $region20: #{tpu_custom_call.1} parent=0 // pred_region
    _
  $region21: #{tpu_custom_call.1} parent=0 // pred_fallthru
    _
  %v20 = vld [vmem:[%s0] sm:$0xff]
  %v21 = vld [vmem:[%s0 + $0x8] sm:$0xff]
  %v22 = vld [vmem:[%s0 + $0x10] sm:$0xff]
  %v23 = vld [vmem:[%s0 + $0x18] sm:$0xff]
  %v24 = vld [vmem:[%s1] sm:$0xff]
  %v25 = vld [vmem:[%s1 + $0x8] sm:$0xff]
  %v26 = vld [vmem:[%s1 + $0x10] sm:$0xff]
  %v27 = vld [vmem:[%s1 + $0x18] sm:$0xff]
  %v28 = vld [vmem:[%s2] sm:$0xff]
  %v29 = vld [vmem:[%s2 + $0x8] sm:$0xff]
  %v30 = vld [vmem:[%s2 + $0x10] sm:$0xff]
  %v31 = vld [vmem:[%s2 + $0x18] sm:$0xff]
  %33 = vset.pattern.permute.xlu0 0
  %34 = vperm.xlu0 %33, %v28
  %v35 = vpop.permute.xlu0 %34
  %38 = vset.pattern.permute.xlu0 0
  %39 = vperm.xlu0 %38, %v29
  %v40 = vpop.permute.xlu0 %39
  %43 = vset.pattern.permute.xlu0 0
  %44 = vperm.xlu0 %43, %v30
  %v45 = vpop.permute.xlu0 %44
  %48 = vset.pattern.permute.xlu0 0
  %49 = vperm.xlu0 %48, %v31
  %v50 = vpop.permute.xlu0 %49
  %vm52 = vcmask 261120
  %v54 = vsel %vm52, %v24, 0
  %v57 = vsel %vm52, %v25, 0
  %v60 = vsel %vm52, %v26, 0
  %v63 = vsel %vm52, %v27, 0
  %65 = vmatprep.subr.mxu0 0.0
  %66 = vmatpush1.msra.mxu0 %v20
  %67 = vmatprep.subr.mxu0 0.0
  %68 = vmatpush1.msra.mxu0 %v21
  %69 = vmatprep.subr.mxu0 0.0
  %70 = vmatpush1.msra.mxu0 %v22
  %71 = vmatprep.subr.mxu0 0.0
  %72 = vmatpush1.msra.mxu0 %v23
  %73 = vmatprep.subr.mxu0 0.0
  %74 = vmatpush1.msra.mxu0 0.0
  %75 = vmatprep.subr.mxu0 0.0
  %76 = vmatpush1.msra.mxu0 0.0
  %77 = vmatprep.subr.mxu0 0.0
  %78 = vmatpush1.msra.mxu0 0.0
  %79 = vmatprep.subr.mxu0 0.0
  %80 = vmatpush1.msra.mxu0 0.0
  %81 = vmatprep.subr.mxu0 0.0
  %82 = vmatpush1.msra.mxu0 0.0
  %83 = vmatprep.subr.mxu0 0.0
  %84 = vmatpush1.msra.mxu0 0.0
  %85 = vmatprep.subr.mxu0 0.0
  %86 = vmatpush1.msra.mxu0 0.0
  %87 = vmatprep.subr.mxu0 0.0
  %88 = vmatpush1.msra.mxu0 0.0
  %89 = vmatprep.subr.mxu0 0.0
  %90 = vmatpush1.msra.mxu0 0.0
  %91 = vmatprep.subr.mxu0 0.0
  %92 = vmatpush1.msra.mxu0 0.0
  %93 = vmatprep.subr.mxu0 0.0
  %94 = vmatpush1.msra.mxu0 0.0
  %95 = vmatprep.subr.mxu0 0.0
  %96 = vmatpush1.msra.mxu0 0.0
  %97 = vmatprep.subr.mxu0 0.0
  %98 = vmatpush1.msra.mxu0 0.0
  %99 = vmatprep.subr.mxu0 0.0
  %100 = vmatpush1.msra.mxu0 0.0
  %101 = vmatprep.subr.mxu0 0.0
  %102 = vmatpush1.msra.mxu0 0.0
  %103 = vmatprep.subr.mxu0 0.0
  %104 = vmatpush1.msra.mxu0 0.0
  %105 = vmatprep.subr.mxu0 0.0
  %106 = vmatpush1.msra.mxu0 0.0
  %107 = vmatprep.subr.mxu0 0.0
  %108 = vmatpush1.msra.mxu0 0.0
  %109 = vmatprep.subr.mxu0 0.0
  %110 = vmatpush1.msra.mxu0 0.0
  %111 = vmatprep.subr.mxu0 0.0
  %112 = vmatpush1.msra.mxu0 0.0
  %113 = vmatprep.subr.mxu0 0.0
  %114 = vmatpush1.msra.mxu0 0.0
  %115 = vmatprep.subr.mxu0 0.0
  %116 = vmatpush1.msra.mxu0 0.0
  %117 = vmatprep.subr.mxu0 0.0
  %118 = vmatpush1.msra.mxu0 0.0
  %119 = vmatprep.subr.mxu0 0.0
  %120 = vmatpush1.msra.mxu0 0.0
  %121 = vmatprep.subr.mxu0 0.0
  %122 = vmatpush1.msra.mxu0 0.0
  %123 = vmatprep.subr.mxu0 0.0
  %124 = vmatpush1.msra.mxu0 0.0
  %125 = vmatprep.subr.mxu0 0.0
  %126 = vmatpush1.msra.mxu0 0.0
  %127 = vmatprep.subr.mxu0 0.0
  %128 = vmatpush1.msra.mxu0 0.0
  %129 = vmatprep.mubr.f32.mxu0 0.0
  %130 = vmatmul.mubr.f32.gmra.mrb[0].mxu0 %v54
  %v131 = vpop.f32.mrb[0].mxu0
  %v132 = vadd.f32 %v35, %v131
  %v133 = vpop.f32.mrb[0].mxu0
  %134 = vmatprep.mubr.f32.mxu0 0.0
  %135 = vmatmul.mubr.f32.gmra.mrb[0].mxu0 %v57
  %v136 = vpop.f32.mrb[0].mxu0
  %v137 = vadd.f32 %v40, %v136
  %v138 = vpop.f32.mrb[0].mxu0
  %139 = vmatprep.mubr.f32.mxu0 0.0
  %140 = vmatmul.mubr.f32.gmra.mrb[0].mxu0 %v60
  %v141 = vpop.f32.mrb[0].mxu0
  %v142 = vadd.f32 %v45, %v141
  %v143 = vpop.f32.mrb[0].mxu0
  %144 = vmatprep.mubr.f32.mxu0 0.0
  %145 = vmatmul.mubr.f32.gmra.mrb[0].mxu0 %v63
  %v146 = vpop.f32.mrb[0].mxu0
  %v147 = vadd.f32 %v50, %v146
  %v148 = vpop.f32.mrb[0].mxu0
  %149 = vdwg.mxu0
  %v150 = vmax.f32 %v132, 0.0
  %v151 = vmax.f32 %v137, 0.0
  %v152 = vmax.f32 %v142, 0.0
  %v153 = vmax.f32 %v147, 0.0
  %v154 = vld [vmem:[%s3] sm:$0xff]
  %v155 = vld [vmem:[%s4] sm:$0xff]
  %157 = vset.pattern.permute.xlu0 0
  %158 = vperm.xlu0 %157, %v155
  %v159 = vpop.permute.xlu0 %158
  %v162 = vsel %vm52, %v154, 0
  %164 = vmatprep.subr.mxu0 0.0
  %165 = vmatpush1.msra.mxu0 %v150
  %166 = vmatprep.subr.mxu0 0.0
  %167 = vmatpush1.msra.mxu0 %v151
  %168 = vmatprep.subr.mxu0 0.0
  %169 = vmatpush1.msra.mxu0 %v152
  %170 = vmatprep.subr.mxu0 0.0
  %171 = vmatpush1.msra.mxu0 %v153
  %172 = vmatprep.subr.mxu0 0.0
  %173 = vmatpush1.msra.mxu0 0.0
  %174 = vmatprep.subr.mxu0 0.0
  %175 = vmatpush1.msra.mxu0 0.0
  %176 = vmatprep.subr.mxu0 0.0
  %177 = vmatpush1.msra.mxu0 0.0
  %178 = vmatprep.subr.mxu0 0.0
  %179 = vmatpush1.msra.mxu0 0.0
  %180 = vmatprep.subr.mxu0 0.0
  %181 = vmatpush1.msra.mxu0 0.0
  %182 = vmatprep.subr.mxu0 0.0
  %183 = vmatpush1.msra.mxu0 0.0
  %184 = vmatprep.subr.mxu0 0.0
  %185 = vmatpush1.msra.mxu0 0.0
  %186 = vmatprep.subr.mxu0 0.0
  %187 = vmatpush1.msra.mxu0 0.0
  %188 = vmatprep.subr.mxu0 0.0
  %189 = vmatpush1.msra.mxu0 0.0
  %190 = vmatprep.subr.mxu0 0.0
  %191 = vmatpush1.msra.mxu0 0.0
  %192 = vmatprep.subr.mxu0 0.0
  %193 = vmatpush1.msra.mxu0 0.0
  %194 = vmatprep.subr.mxu0 0.0
  %195 = vmatpush1.msra.mxu0 0.0
  %196 = vmatprep.subr.mxu0 0.0
  %197 = vmatpush1.msra.mxu0 0.0
  %198 = vmatprep.subr.mxu0 0.0
  %199 = vmatpush1.msra.mxu0 0.0
  %200 = vmatprep.subr.mxu0 0.0
  %201 = vmatpush1.msra.mxu0 0.0
  %202 = vmatprep.subr.mxu0 0.0
  %203 = vmatpush1.msra.mxu0 0.0
  %204 = vmatprep.subr.mxu0 0.0
  %205 = vmatpush1.msra.mxu0 0.0
  %206 = vmatprep.subr.mxu0 0.0
  %207 = vmatpush1.msra.mxu0 0.0
  %208 = vmatprep.subr.mxu0 0.0
  %209 = vmatpush1.msra.mxu0 0.0
  %210 = vmatprep.subr.mxu0 0.0
  %211 = vmatpush1.msra.mxu0 0.0
  %212 = vmatprep.subr.mxu0 0.0
  %213 = vmatpush1.msra.mxu0 0.0
  %214 = vmatprep.subr.mxu0 0.0
  %215 = vmatpush1.msra.mxu0 0.0
  %216 = vmatprep.subr.mxu0 0.0
  %217 = vmatpush1.msra.mxu0 0.0
  %218 = vmatprep.subr.mxu0 0.0
  %219 = vmatpush1.msra.mxu0 0.0
  %220 = vmatprep.subr.mxu0 0.0
  %221 = vmatpush1.msra.mxu0 0.0
  %222 = vmatprep.subr.mxu0 0.0
  %223 = vmatpush1.msra.mxu0 0.0
  %224 = vmatprep.subr.mxu0 0.0
  %225 = vmatpush1.msra.mxu0 0.0
  %226 = vmatprep.subr.mxu0 0.0
  %227 = vmatpush1.msra.mxu0 0.0
  %228 = vmatprep.mubr.f32.mxu0 0.0
  %229 = vmatmul.mubr.f32.gmra.mrb[0].mxu0 %v162
  %v230 = vpop.f32.mrb[0].mxu0
  %v231 = vadd.f32 %v159, %v230
  %v232 = vpop.f32.mrb[0].mxu0
  %233 = vdwg.mxu0
  %vm234 = vcmask 15360
  %235 = vst.msk [vmem:[%s5] sm:$0xff] %vm234, %v231
  // Predicated region
  $region22: #{tpu_custom_call.1} parent=0 // pred_check
    _
  $region23: #{tpu_custom_call.1} parent=0 // pred_check_branch
    %237 = sbr.rel (0) target = $region25
  $region24: #{tpu_custom_call.1} parent=0 // pred_region
    _
  $region25: #{tpu_custom_call.1} parent=0 // pred_fallthru
    _
  // Predicated region
  $region26: #{tpu_custom_call.1} parent=0 // pred_check
    _
  $region27: #{tpu_custom_call.1} parent=0 // pred_check_branch
    %239 = sbr.rel (0) target = $region29
  $region28: #{tpu_custom_call.1} parent=0 // pred_region
    _
  $region29: #{tpu_custom_call.1} parent=0 // pred_fallthru
    _

</llo_original>
